<compile_context>
chip_gen: v7x
topology: tpu7x:2x2x1
jax: 0.10.0
libtpu: 0.0.40
codegen_flags: <defaults>
</compile_context>

<pallas_src>
import numpy as np
import jax
import jax.numpy as jnp
from jax.experimental import pallas as pl
from jax.experimental.pallas import tpu as pltpu


def _round_up(x, m):
    return (x + m - 1) // m * m


def patch_encoder_kernel(xu_ref, w_ref, aux_ref, t_ref, o_ref):
    """Fused conv1d-as-matmul (MXU) + bias + sinusoidal PE (VPU/EUP) for one row tile."""
    # (TM, M*K) @ (M*K, Dp) on the MXU, f32 accumulate, default precision.
    patches = jnp.dot(xu_ref[...], w_ref[...], preferred_element_type=jnp.float32)

    aux = aux_ref[...]               # (3, Dp) resident table: [bias; freq; phase]
    bias = aux[0:1, :]               # (1, Dp)
    freq = aux[1:2, :]               # (1, Dp)  freq[2i] = freq[2i+1] = div_term[i]
    phase = aux[2:3, :]              # (1, Dp)  0 on even lanes, pi/2 on odd lanes

    t = t_ref[...]                   # (TM, 1) patch median timestamps
    pe = jnp.sin(t * freq + phase)   # cos(x) == sin(x + pi/2): one EUP op / element

    o_ref[...] = (patches + bias + pe).astype(o_ref.dtype)


def time_series_patch_encoder(x, timestamps, weight, bias, *,
                              kernel_size, stride, padding, block_rows=1024):
    """x: (B, L, M) f32, timestamps: (B, L) f32, weight: (d_model, M, K), bias: (d_model,).
       Returns (B, num_patches, d_model) f32."""
    B, L, M = x.shape
    d_model = weight.shape[0]
    K = kernel_size
    P = (L + 2 * padding - K) // stride + 1
    n_rows = B * P
    MK = M * K

    # ---- im2col unfold: single strided gather (channel-major columns) ----
    xp = jnp.pad(x.astype(jnp.float32), ((0, 0), (padding, padding), (0, 0)))
    pos = jnp.arange(P)[:, None] * stride + jnp.arange(K)[None, :]        # (P, K) into padded L
    win = xp[:, pos, :]                                                   # (B, P, K, M)
    x_unf = jnp.transpose(win, (0, 1, 3, 2)).reshape(n_rows, MK)          # col index = c*K + k

    # weight in the same (channel, tap) ordering: w_mat[c*K + k, o] = weight[o, c, k]
    w_mat = jnp.transpose(weight.astype(jnp.float32), (1, 2, 0)).reshape(MK, d_model)

    # ---- patch median times, vectorized (torch.median = lower of the two middle values) ----
    b_idx = jnp.arange(P) * stride - padding                              # (P,) into unpadded L
    tpos = b_idx[:, None] + jnp.arange(K)[None, :]                        # (P, K)
    valid = (tpos >= 0) & (tpos < L)                                      # (P, K)
    tw = timestamps[:, jnp.clip(tpos, 0, L - 1)]                          # (B, P, K)
    tw = jnp.sort(jnp.where(valid[None], tw, jnp.inf), axis=-1)           # invalid sorts last
    med_idx = (jnp.sum(valid, axis=-1) - 1) // 2                          # (P,)
    patch_t = jnp.take_along_axis(
        tw, jnp.broadcast_to(med_idx[None, :, None], (B, P, 1)), axis=-1)[..., 0]
    patch_t = patch_t.reshape(n_rows, 1).astype(jnp.float32)

    # ---- lane-dense padding of d_model + fused resident aux tile (bias / freq / phase) ----
    Dp = _round_up(d_model, 128)
    w_pad = jnp.zeros((MK, Dp), jnp.float32).at[:, :d_model].set(w_mat)
    half = np.exp(np.arange(0, d_model, 2) * (-np.log(10000.0) / d_model)).astype(np.float32)
    freq = np.zeros((Dp,), np.float32)
    freq[0:d_model:2] = half
    freq[1:d_model:2] = half
    phase = np.zeros((Dp,), np.float32)
    phase[1:d_model:2] = np.float32(np.pi / 2.0)
    aux = jnp.zeros((3, Dp), jnp.float32)
    aux = aux.at[0, :d_model].set(bias.astype(jnp.float32))
    aux = aux.at[1].set(jnp.asarray(freq))
    aux = aux.at[2].set(jnp.asarray(phase))

    # ---- row tiling: pad rows to a multiple of the row tile ----
    block_rows = max(8, _round_up(block_rows, 8))
    tm = min(block_rows, _round_up(n_rows, 8))
    n_pad = _round_up(n_rows, tm)
    x_unf = jnp.pad(x_unf, ((0, n_pad - n_rows), (0, 0)))
    patch_t = jnp.pad(patch_t, ((0, n_pad - n_rows), (0, 0)))

    out = pl.pallas_call(
        patch_encoder_kernel,
        out_shape=jax.ShapeDtypeStruct((n_pad, Dp), jnp.float32),
        grid=(n_pad // tm,),
        in_specs=[
            pl.BlockSpec((tm, MK), lambda i: (i, 0)),   # row tile of patches (pipelined)
            pl.BlockSpec((MK, Dp), lambda i: (0, 0)),   # weights: VMEM-resident
            pl.BlockSpec((3, Dp), lambda i: (0, 0)),    # bias/freq/phase: VMEM-resident
            pl.BlockSpec((tm, 1), lambda i: (i, 0)),    # patch median times (pipelined)
        ],
        out_specs=pl.BlockSpec((tm, Dp), lambda i: (i, 0)),
        compiler_params=pltpu.CompilerParams(dimension_semantics=("parallel",)),
    )(x_unf, w_pad, aux, patch_t)

    return out[:n_rows, :d_model].reshape(B, P, d_model)


def _reference(x, timestamps, weight, bias, *, kernel_size, stride, padding):
    """Pure NumPy float64 reference mirroring the PyTorch forward."""
    x = np.asarray(x, np.float64)
    ts = np.asarray(timestamps, np.float64)
    w = np.asarray(weight, np.float64)
    b = np.asarray(bias, np.float64)
    B, L, M = x.shape
    d_model = w.shape[0]
    K = kernel_size
    P = (L + 2 * padding - K) // stride + 1
    xp = np.pad(x, ((0, 0), (padding, padding), (0, 0)))
    div_term = np.exp(np.arange(0, d_model, 2) * (-np.log(10000.0) / d_model))
    out = np.zeros((B, P, d_model))
    for bi in range(B):
        for p in range(P):
            winp = xp[bi, p * stride: p * stride + K, :]            # (K, M)
            out[bi, p] = np.einsum("kc,dck->d", winp, w) + b
            s = max(p * stride - padding, 0)
            e = min(p * stride - padding + K, L)
            t = np.sort(ts[bi, s:e])[(e - s - 1) // 2]              # torch.median (lower)
            out[bi, p, 0::2] += np.sin(t * div_term)
            out[bi, p, 1::2] += np.cos(t * div_term)
    return out


if __name__ == "__main__":
    # Shapes from the module spec: batch=2, time_steps=100, num_features=4, d_model=32.
    B, L, M, d_model = 2, 100, 4, 32
    kernel_size, stride, padding = 4, 2, 1

    key = jax.random.PRNGKey(0)
    kx, kt, kw, kb = jax.random.split(key, 4)

    x = jax.random.normal(kx, (B, L, M), dtype=jnp.float32)
    timestamps = jnp.sort(jax.random.uniform(kt, (B, L), dtype=jnp.float32) * 100.0, axis=1)

    fan_in = M * kernel_size
    bound = 1.0 / np.sqrt(fan_in)
    weight = jax.random.uniform(kw, (d_model, M, kernel_size),
                                dtype=jnp.float32, minval=-bound, maxval=bound)
    bias = jax.random.uniform(kb, (d_model,), dtype=jnp.float32, minval=-bound, maxval=bound)

    # Small row tile here so the demo exercises a multi-step pipelined grid (100 rows -> 4 steps);
    # production shapes would use the larger default block_rows.
    out = time_series_patch_encoder(x, timestamps, weight, bias,
                                    kernel_size=kernel_size, stride=stride,
                                    padding=padding, block_rows=32)
    out = jax.block_until_ready(out)

    ref = _reference(x, timestamps, weight, bias,
                     kernel_size=kernel_size, stride=stride, padding=padding)
    # Tolerance covers default MXU precision (bf16-pass matmul) vs the float64 reference.
    np.testing.assert_allclose(np.asarray(out), ref, atol=2e-2, rtol=2e-2)
    print("KERNEL_OK")
</pallas_src>

<mosaic_0001>
module attributes {stable_mosaic.version = 11 : i64} {
  func.func @patch_encoder_kernel(%arg0: i32, %arg1: memref<32x16xf32, #tpu.memory_space<vmem>>, %arg2: memref<16x128xf32, #tpu.memory_space<vmem>>, %arg3: memref<3x128xf32, #tpu.memory_space<vmem>>, %arg4: memref<32x1xf32, #tpu.memory_space<vmem>>, %arg5: memref<32x128xf32, #tpu.memory_space<vmem>>) attributes {dimension_semantics = [#tpu.dimension_semantics<parallel>], iteration_bounds = array<i64: 4>, scalar_prefetch = 0 : i64, scratch_operands = 0 : i64, tpu.core_type = #tpu.core_type<tc>, window_params = [{transform_indices = @transform_0, window_bounds = array<i64: 32, 16>}, {pipeline_mode = #tpu.pipeline_mode<synchronous>, transform_indices = @transform_1, window_bounds = array<i64: 16, 128>}, {pipeline_mode = #tpu.pipeline_mode<synchronous>, transform_indices = @transform_2, window_bounds = array<i64: 3, 128>}, {transform_indices = @transform_3, window_bounds = array<i64: 32, 1>}, {transform_indices = @transform_4, window_bounds = array<i64: 32, 128>}]} {
    %c0 = arith.constant 0 : index
    %c0_0 = arith.constant 0 : index
    %0 = vector.load %arg1[%c0, %c0_0] : memref<32x16xf32, #tpu.memory_space<vmem>>, vector<32x16xf32>
    %c0_1 = arith.constant 0 : index
    %c0_2 = arith.constant 0 : index
    %1 = vector.load %arg2[%c0_1, %c0_2] : memref<16x128xf32, #tpu.memory_space<vmem>>, vector<16x128xf32>
    %cst = arith.constant dense<0.000000e+00> : vector<32x128xf32>
    %2 = tpu.matmul %0, %1, %cst {dimension_numbers = #tpu.dot_dimension_numbers<[1], [0], [0], [1], [0, 0, 1, 1], [], []>} : vector<32x16xf32>, vector<16x128xf32>, vector<32x128xf32> -> vector<32x128xf32>
    %c0_3 = arith.constant 0 : index
    %c0_4 = arith.constant 0 : index
    %3 = vector.load %arg3[%c0_3, %c0_4] : memref<3x128xf32, #tpu.memory_space<vmem>>, vector<3x128xf32>
    %4 = vector.extract_strided_slice %3 {offsets = [0, 0], sizes = [1, 128], strides = [1, 1]} : vector<3x128xf32> to vector<1x128xf32>
    %5 = vector.extract_strided_slice %3 {offsets = [1, 0], sizes = [1, 128], strides = [1, 1]} : vector<3x128xf32> to vector<1x128xf32>
    %6 = vector.extract_strided_slice %3 {offsets = [2, 0], sizes = [1, 128], strides = [1, 1]} : vector<3x128xf32> to vector<1x128xf32>
    %c0_5 = arith.constant 0 : index
    %c0_6 = arith.constant 0 : index
    %7 = vector.load %arg4[%c0_5, %c0_6] : memref<32x1xf32, #tpu.memory_space<vmem>>, vector<32x1xf32>
    %8 = vector.broadcast %7 : vector<32x1xf32> to vector<32x128xf32>
    %9 = vector.broadcast %5 : vector<1x128xf32> to vector<32x128xf32>
    %10 = arith.mulf %8, %9 : vector<32x128xf32>
    %11 = vector.broadcast %6 : vector<1x128xf32> to vector<32x128xf32>
    %12 = arith.addf %10, %11 : vector<32x128xf32>
    %13 = math.sin %12 : vector<32x128xf32>
    %14 = vector.broadcast %4 : vector<1x128xf32> to vector<32x128xf32>
    %15 = arith.addf %2, %14 : vector<32x128xf32>
    %16 = arith.addf %15, %13 : vector<32x128xf32>
    %c0_7 = arith.constant 0 : index
    %c0_8 = arith.constant 0 : index
    %17 = vector.load %arg5[%c0_7, %c0_8] : memref<32x128xf32, #tpu.memory_space<vmem>>, vector<32x128xf32>
    tpu.vector_store %arg5[%c0_7, %c0_8], %16 {strides = array<i32>} : memref<32x128xf32, #tpu.memory_space<vmem>>, vector<32x128xf32>,
    return
  }
  func.func @transform_0(%arg0: i32) -> (i32, i32) {
    %c0_i32 = arith.constant 0 : i32
    %c0_i32_0 = arith.constant 0 : i32
    return %arg0, %c0_i32 : i32, i32
  }
  func.func @transform_1(%arg0: i32) -> (i32, i32) {
    %c0_i32 = arith.constant 0 : i32
    %c0_i32_0 = arith.constant 0 : i32
    %c0_i32_1 = arith.constant 0 : i32
    return %c0_i32, %c0_i32_0 : i32, i32
  }
  func.func @transform_2(%arg0: i32) -> (i32, i32) {
    %c0_i32 = arith.constant 0 : i32
    %c0_i32_0 = arith.constant 0 : i32
    %c0_i32_1 = arith.constant 0 : i32
    return %c0_i32, %c0_i32_0 : i32, i32
  }
  func.func @transform_3(%arg0: i32) -> (i32, i32) {
    %c0_i32 = arith.constant 0 : i32
    %c0_i32_0 = arith.constant 0 : i32
    return %arg0, %c0_i32 : i32, i32
  }
  func.func @transform_4(%arg0: i32) -> (i32, i32) {
    %c0_i32 = arith.constant 0 : i32
    %c0_i32_0 = arith.constant 0 : i32
    return %arg0, %c0_i32 : i32, i32
  }
}

</mosaic_0001>

<llo_original>
// kernel: tpu_custom_call.1
$region0: #{tpu_custom_call.1}
  #allocation0 [shape = 'u32[]', space=smem, size = 0x4, offset = 0x4, fixed_abs, tag = 'smem constant byte address 0x4 - core index']
  #allocation1 [shape = 'u32[144,128]{1,0:T(1,128)}', space=vmem, size = 0x12000, scoped, tag = 'internal scratch']
  %s0 = inlined_call_operand.vmem [shape: f32[128,16], index: 0, kind: input, shape index: {}]
  %s1 = inlined_call_operand.vmem [shape: f32[16,128], index: 1, kind: input, shape index: {}]
  %s2 = inlined_call_operand.vmem [shape: f32[3,128], index: 2, kind: input, shape index: {}]
  %s3 = inlined_call_operand.vmem [shape: f32[128,1], index: 3, kind: input, shape index: {}]
  %s4 = inlined_call_operand.hbm [shape: f32[128,128], index: 4, kind: output, shape index: {}]
  %s5 = sld [smem:[#allocation0]]
  $region49: #{tpu_custom_call.1} parent=0
    _
  %s7 = ssub.s32 1, %s5
  %s8 = scalar_select 0, %s7, %s5
  $region1: #{tpu_custom_call.1} parent=0
    #allocation2 [shape = 'u8[32768]{0}', space=vmem, size = 0x8000, scoped, tag = 'output window, operand 0']
    #allocation3 [shape = 's32[2]{0}', space=sflag, size = 0x8, scoped, tag = 'scoped memory for tpu_custom_call.1']
    %9 = vsyncpa [#allocation3], 0
    %s10 = scalar_lea.sflag [#allocation3], 1
    %11 = vsyncpa %s10, 0
    loop: start=0, step=1, limit=6
    $region2: #{tpu_custom_call.1} parent=1 // loop_pre_header
      _
    $region3: #{tpu_custom_call.1} parent=1 // loop_header
      %s13 = sphi 0, %s17
      %p14 = scmp.ge.s32.totalorder %s13, 6
      %s23 = sphi 0, %s25
      %s26 = sphi 0, %s23
      %s27 = sphi 0, %s26
      %s43 = sphi 0, %s27
      %s47 = sphi 0, %s47
      %s49 = sphi 0, %s47
      %s50 = sphi 0, %s49
      %s64 = sphi 0, %s50
      %s68 = sphi 0, %s68
      %s70 = sphi 0, %s68
      %s71 = sphi 0, %s70
      %s85 = sphi 0, %s71
      %s91 = sphi 0, %s93
      %s94 = sphi 0, %s91
      %s95 = sphi 0, %s94
      %s111 = sphi 0, %s95
      %s117 = sphi 0, %s119
      %s120 = sphi 0, %s117
      %s121 = sphi 0, %s120
      %s137 = sphi 0, %s121
    $region4: #{tpu_custom_call.1} parent=1 // loop_header_branch
      %16 = sbr.rel (%p14) target = $region8
    $region5: #{tpu_custom_call.1} parent=1 // loop_body
      %s18 = ssub.s32 %s13, 1
      %s19 = ssub.s32 %s13, 2
      %s20 = sadd.s32 %s13, 1
      %s21 = ssub.s32 %s13, %s20
      %p22 = scmp.eq.s32.totalorder %s21, 0
      %s24 = sadd.s32 %s23, 1
      %s25 = scalar_select %p22, %s23, %s24
      %p28 = pneg %p22
      %p29 = scmp.eq.s32.totalorder %s13, 3
      %p30 = por %p28, %p29
      %p31 = scmp.ne.s32.totalorder %s23, %s26
      %p32 = scmp.eq.s32.totalorder %s13, 0
      %p33 = por %p31, %p32
      %p34 = scmp.ne.s32.totalorder %s23, %s26
      %p35 = scmp.eq.s32.totalorder %s18, 3
      %p36 = por %p34, %p35
      %p37 = scmp.ne.s32.totalorder %s26, %s27
      %p38 = scmp.eq.s32.totalorder %s18, 0
      %p39 = por %p37, %p38
      %p40 = scmp.ne.s32.totalorder %s26, %s27
      %p41 = scmp.eq.s32.totalorder %s19, 3
      %p42 = por %p40, %p41
      %p44 = scmp.ne.s32.totalorder %s27, %s43
      %p45 = scmp.eq.s32.totalorder %s19, 0
      %p46 = por %p44, %p45
      %s48 = sadd.s32 %s47, 1
      %p51 = scmp.eq.s32.totalorder %s13, 3
      %p52 = scmp.ne.s32.totalorder %s47, %s49
      %p53 = scmp.eq.s32.totalorder %s13, 0
      %p54 = por %p52, %p53
      %p55 = scmp.ne.s32.totalorder %s47, %s49
      %p56 = scmp.eq.s32.totalorder %s18, 3
      %p57 = por %p55, %p56
      %p58 = scmp.ne.s32.totalorder %s49, %s50
      %p59 = scmp.eq.s32.totalorder %s18, 0
      %p60 = por %p58, %p59
      %p61 = scmp.ne.s32.totalorder %s49, %s50
      %p62 = scmp.eq.s32.totalorder %s19, 3
      %p63 = por %p61, %p62
      %p65 = scmp.ne.s32.totalorder %s50, %s64
      %p66 = scmp.eq.s32.totalorder %s19, 0
      %p67 = por %p65, %p66
      %s69 = sadd.s32 %s68, 1
      %p72 = scmp.eq.s32.totalorder %s13, 3
      %p73 = scmp.ne.s32.totalorder %s68, %s70
      %p74 = scmp.eq.s32.totalorder %s13, 0
      %p75 = por %p73, %p74
      %p76 = scmp.ne.s32.totalorder %s68, %s70
      %p77 = scmp.eq.s32.totalorder %s18, 3
      %p78 = por %p76, %p77
      %p79 = scmp.ne.s32.totalorder %s70, %s71
      %p80 = scmp.eq.s32.totalorder %s18, 0
      %p81 = por %p79, %p80
      %p82 = scmp.ne.s32.totalorder %s70, %s71
      %p83 = scmp.eq.s32.totalorder %s19, 3
      %p84 = por %p82, %p83
      %p86 = scmp.ne.s32.totalorder %s71, %s85
      %p87 = scmp.eq.s32.totalorder %s19, 0
      %p88 = por %p86, %p87
      %s89 = ssub.s32 %s13, %s20
      %p90 = scmp.eq.s32.totalorder %s89, 0
      %s92 = sadd.s32 %s91, 1
      %s93 = scalar_select %p90, %s91, %s92
      %p96 = pneg %p90
      %p97 = scmp.eq.s32.totalorder %s13, 3
      %p98 = por %p96, %p97
      %p99 = scmp.ne.s32.totalorder %s91, %s94
      %p100 = scmp.eq.s32.totalorder %s13, 0
      %p101 = por %p99, %p100
      %p102 = scmp.ne.s32.totalorder %s91, %s94
      %p103 = scmp.eq.s32.totalorder %s18, 3
      %p104 = por %p102, %p103
      %p105 = scmp.ne.s32.totalorder %s94, %s95
      %p106 = scmp.eq.s32.totalorder %s18, 0
      %p107 = por %p105, %p106
      %p108 = scmp.ne.s32.totalorder %s94, %s95
      %p109 = scmp.eq.s32.totalorder %s19, 3
      %p110 = por %p108, %p109
      %p112 = scmp.ne.s32.totalorder %s95, %s111
      %p113 = scmp.eq.s32.totalorder %s19, 0
      %p114 = por %p112, %p113
      %s115 = ssub.s32 %s13, %s20
      %p116 = scmp.eq.s32.totalorder %s115, 0
      %s118 = sadd.s32 %s117, 1
      %s119 = scalar_select %p116, %s117, %s118
      %p122 = pneg %p116
      %p123 = scmp.eq.s32.totalorder %s13, 3
      %p124 = por %p122, %p123
      %p125 = scmp.ne.s32.totalorder %s117, %s120
      %p126 = scmp.eq.s32.totalorder %s13, 0
      %p127 = por %p125, %p126
      %p128 = scmp.ne.s32.totalorder %s117, %s120
      %p129 = scmp.eq.s32.totalorder %s18, 3
      %p130 = por %p128, %p129
      %p131 = scmp.ne.s32.totalorder %s120, %s121
      %p132 = scmp.eq.s32.totalorder %s18, 0
      %p133 = por %p131, %p132
      %p134 = scmp.ne.s32.totalorder %s120, %s121
      %p135 = scmp.eq.s32.totalorder %s19, 3
      %p136 = por %p134, %p135
      %p138 = scmp.ne.s32.totalorder %s121, %s137
      %p139 = scmp.eq.s32.totalorder %s19, 0
      %p140 = por %p138, %p139
      %p141 = scmp.le.s32.totalorder 1, %s13
      %p142 = scmp.lt.s32.totalorder %s13, 5
      %p143 = pnand %p141, %p142
      %p144 = pneg %p143
      // Predicated region
      $region9: #{tpu_custom_call.1} parent=5 // pred_check
        _
      $region10: #{tpu_custom_call.1} parent=5 // pred_check_branch
        %146 = sbr.rel (%p143) target = $region12
      $region11: #{tpu_custom_call.1} parent=5 // pred_region
        %s147 = ssub.s32 %s13, 1
        // Predicated region
        $region13: #{tpu_custom_call.1} parent=11 // pred_check
          %p148 = pneg %p60
        $region14: #{tpu_custom_call.1} parent=11 // pred_check_branch
          %150 = sbr.rel (%p148) target = $region16
        $region15: #{tpu_custom_call.1} parent=11 // pred_region
          _
        $region16: #{tpu_custom_call.1} parent=11 // pred_fallthru
          _
        // Predicated region
        $region17: #{tpu_custom_call.1} parent=11 // pred_check
          %p151 = pneg %p81
        $region18: #{tpu_custom_call.1} parent=11 // pred_check_branch
          %153 = sbr.rel (%p151) target = $region20
        $region19: #{tpu_custom_call.1} parent=11 // pred_region
          _
        $region20: #{tpu_custom_call.1} parent=11 // pred_fallthru
          _
      $region12: #{tpu_custom_call.1} parent=5 // pred_fallthru
        _
      %p154 = scmp.lt.s32.totalorder %s13, 4
      // Predicated region
      $region21: #{tpu_custom_call.1} parent=5 // pred_check
        %p155 = pneg %p154
      $region22: #{tpu_custom_call.1} parent=5 // pred_check_branch
        %157 = sbr.rel (%p155) target = $region24
      $region23: #{tpu_custom_call.1} parent=5 // pred_region
        // Predicated region
        $region25: #{tpu_custom_call.1} parent=23 // pred_check
          %p158 = pneg %p33
        $region26: #{tpu_custom_call.1} parent=23 // pred_check_branch
          %160 = sbr.rel (%p158) target = $region28
        $region27: #{tpu_custom_call.1} parent=23 // pred_region
          %s161 = smul.u32 4, %s13
          %p162 = scmp.lt.s32.totalorder %s161, 15
          %s163 = scalar_select %p162, %s161, 15
          %s164 = smul.addr %s163, 8
          %s165 = scalar_lea.vmem %s0, %s164
          %s166 = smul.u32 4, %s13
        $region28: #{tpu_custom_call.1} parent=23 // pred_fallthru
          _
        // Predicated region
        $region29: #{tpu_custom_call.1} parent=23 // pred_check
          %p167 = pneg %p101
        $region30: #{tpu_custom_call.1} parent=23 // pred_check_branch
          %169 = sbr.rel (%p167) target = $region32
        $region31: #{tpu_custom_call.1} parent=23 // pred_region
          %s170 = smul.u32 4, %s13
          %p171 = scmp.lt.s32.totalorder %s170, 15
          %s172 = scalar_select %p171, %s170, 15
          %s173 = smul.addr %s172, 8
          %s174 = scalar_lea.vmem %s3, %s173
          %s175 = smul.u32 4, %s13
        $region32: #{tpu_custom_call.1} parent=23 // pred_fallthru
          _
      $region24: #{tpu_custom_call.1} parent=5 // pred_fallthru
        _
      %p176 = scmp.le.s32.totalorder 1, %s13
      %p177 = scmp.lt.s32.totalorder %s13, 5
      %p178 = pnand %p176, %p177
      %p179 = pneg %p178
      // Predicated region
      $region33: #{tpu_custom_call.1} parent=5 // pred_check
        _
      $region34: #{tpu_custom_call.1} parent=5 // pred_check_branch
        %181 = sbr.rel (%p178) target = $region36
      $region35: #{tpu_custom_call.1} parent=5 // pred_region
        %s182 = ssub.s32 %s13, 1
        %s183 = smul.u32 4, %s18
        %p184 = scmp.lt.s32.totalorder %s183, 15
        %s185 = scalar_select %p184, %s183, 15
        %s186 = smul.addr %s185, 8
        %s187 = scalar_lea.vmem %s0, %s186
        %p188 = pneg %p39
        %p189 = pneg %p36
        %p190 = pneg %p60
        %p191 = pneg %p57
        %p192 = pneg %p81
        %p193 = pneg %p78
        %s194 = smul.u32 4, %s18
        %p195 = scmp.lt.s32.totalorder %s194, 15
        %s196 = scalar_select %p195, %s194, 15
        %s197 = smul.addr %s196, 8
        %s198 = scalar_lea.vmem %s3, %s197
        %p199 = pneg %p107
        %p200 = pneg %p104
        %p201 = pneg %p133
        %p202 = pneg %p130
        %s203 = sand.u32 %s120, 1
        %s204 = scalar_lea.sflag [#allocation3], %s203
        %s205 = sand.u32 %s120, 1
        %s206 = smul.addr %s205, 32
        %s207 = scalar_lea.vmem [#allocation2], %s206
        %s208 = smul.u32 4, %s18
        %p209 = scmp.lt.s32.totalorder %s208, 15
        %s210 = scalar_select %p209, %s208, 15
        %s211 = smul.addr %s210, 8
        %s212 = scalar_lea.vmem %s0, %s211
        %s213 = smul.u32 4, %s18
        %s214 = smul.u32 4, %s18
        %p215 = scmp.lt.s32.totalorder %s214, 15
        %s216 = scalar_select %p215, %s214, 15
        %s217 = smul.addr %s216, 8
        %s218 = scalar_lea.vmem %s3, %s217
        %s219 = smul.u32 4, %s18
        %s220 = smul.u32 4, %s18
        %v221 = vld [vmem:[%s212] sm:$0xff]
        %v222 = vld [vmem:[%s212 + $0x8] sm:$0xff]
        %v223 = vld [vmem:[%s212 + $0x10] sm:$0xff]
        %v224 = vld [vmem:[%s212 + $0x18] sm:$0xff]
        %v225 = vld [vmem:[%s1] sm:$0xff]
        %v226 = vld [vmem:[%s1 + $0x8] sm:$0xff]
        %v227 = vld [vmem:[%s2] sm:$0x7]
        %v228 = vld [vmem:[%s218] sm:$0xff]
        %v229 = vld [vmem:[%s218 + $0x8] sm:$0xff]
        %v230 = vld [vmem:[%s218 + $0x10] sm:$0xff]
        %v231 = vld [vmem:[%s218 + $0x18] sm:$0xff]
        %233 = vset.pattern.permute.xlu0 0
        %234 = vperm.xlu0 %233, %v228
        %v235 = vpop.permute.xlu0 %234
        %238 = vset.pattern.permute.xlu0 0
        %239 = vperm.xlu0 %238, %v229
        %v240 = vpop.permute.xlu0 %239
        %243 = vset.pattern.permute.xlu0 0
        %244 = vperm.xlu0 %243, %v230
        %v245 = vpop.permute.xlu0 %244
        %248 = vset.pattern.permute.xlu0 0
        %249 = vperm.xlu0 %248, %v231
        %v250 = vpop.permute.xlu0 %249
        %v252 = vlaneseq
        %v253 = vshrl.u32 %v252, 7
        %v254 = vsub.s32 1, %v253
        %v255 = vrot.slane %v227, %v254
        %v256 = vmul.f32 %v235, %v255
        %v257 = vmul.f32 %v240, %v255
        %v258 = vmul.f32 %v245, %v255
        %v259 = vmul.f32 %v250, %v255
        %v260 = vlaneseq
        %v261 = vshrl.u32 %v260, 7
        %v262 = vsub.s32 2, %v261
        %v263 = vrot.slane %v227, %v262
        %v264 = vadd.f32 %v256, %v263
        %v265 = vadd.f32 %v257, %v263
        %v266 = vadd.f32 %v258, %v263
        %v267 = vadd.f32 %v259, %v263
        %v268 = vand.u32 2147483647, %v264
        %vm269 = vcmp.le.f32.partialorder %v268, 0.7853982
        %vm270 = vcmp.lt.s32.totalorder %v264, 0
        %v271 = vand.u32 %v264, 2139095040
        %v272 = vshrl.u32 %v271, 23
        %v273 = vsub.s32 %v272, 127
        %v274 = vand.u32 2147483647, %v264
        %v275 = vand.u32 %v274, 8388607
        %v276 = vor.u32 %v275, 8388608
        %v277 = vsub.s32 0, %v276
        %v278 = vadd.s32 %v273, 1
        %vm279 = vcmp.gt.s32.totalorder %v278, 0
        %v280 = vsel %vm279, %v278, 0
        %v281 = vshrl.u32 %v280, 5
        %v282 = vand.u32 %v280, 31
        %v283 = vsub.s32 32, %v282
        %v284 = vshrl.u32 683565275, %v283
        %v285 = vshll.u32 683565275, %v282
        %v286 = vshrl.u32 2475754826, %v283
        %v287 = vor.u32 %v285, %v286
        %v288 = vshll.u32 2475754826, %v282
        %v289 = vshrl.u32 2131351028, %v283
        %v290 = vor.u32 %v288, %v289
        %v291 = vshll.u32 2131351028, %v282
        %v292 = vshrl.u32 2102212464, %v283
        %v293 = vor.u32 %v291, %v292
        %v294 = vshll.u32 2102212464, %v282
        %v295 = vshrl.u32 920167782, %v283
        %v296 = vor.u32 %v294, %v295
        %v297 = vshll.u32 920167782, %v282
        %v298 = vshrl.u32 1326507024, %v283
        %v299 = vor.u32 %v297, %v298
        %vm300 = vcmp.lt.s32.totalorder %v281, 1
        %vm301 = vcmp.lt.s32.totalorder %v281, 2
        %vm302 = vcmp.lt.s32.totalorder %v281, 3
        %vm303 = vcmp.lt.s32.totalorder %v281, 4
        %v304 = vsel %vm300, %v284, %v287
        %v305 = vsel %vm303, %v293, 2102212464
        %v306 = vsel %vm302, %v290, %v305
        %v307 = vsel %vm301, %v304, %v306
        %v308 = vsel %vm300, %v287, %v290
        %v309 = vsel %vm303, %v296, 920167782
        %v310 = vsel %vm302, %v293, %v309
        %v311 = vsel %vm301, %v308, %v310
        %v312 = vsel %vm300, %v290, %v293
        %v313 = vsel %vm303, %v299, 1326507024
        %v314 = vsel %vm302, %v296, %v313
        %v315 = vsel %vm301, %v312, %v314
        %v316 = vshll.u32 %v276, 8
        %v317 = vmul.u32.u64.compose %v316, %v315
        %v318 = vextract.low.u32 %v317
        %v319 = vextract.high.u32 %v317
        %v320 = vmul.u32.u64.compose %v316, %v311
        %v321 = vextract.low.u32 %v320
        %v322 = vextract.high.u32 %v320
        %v323 = vmul.u32 %v316, %v307
        %v324 = vadd.s32 %v319, %v321
        %vm325 = vc.u32 %v319, %v321
        %v326 = vadd.s32 %v322, 1
        %v327 = vsel %vm325, %v326, %v322
        %v328 = vadd.s32 %v323, %v327
        %v329 = vadd.s32 %v328, 536870912
        %v330 = vshrl.u32 %v329, 30
        %v331 = vshll.u32 %v330, 30
        %v332 = vsub.s32 %v328, %v331
        %vm333 = vcmp.lt.s32.totalorder %v332, 0
        %v334 = vsub.s32 0, %v332
        %v335 = vsel %vm333, %v334, %v332
        %v336 = vclz %v335
        %v337 = vsub.s32 %v336, 2
        %vm338 = vcmp.gt.s32.totalorder 0, %v337
        %v339 = vsel %vm338, 0, %v337
        %v340 = vsub.s32 32, %v339
        %v341 = vshll.u32 %v332, %v339
        %v342 = vshrl.u32 %v324, %v340
        %v343 = vor.u32 %v341, %v342
        %v344 = vsub.s32 4294967266, %v339
        %v345 = vadd.s32 %v344, 127
        %v346 = vshll.u32 %v345, 23
        %v347 = vor.u32 4788187, %v346
        %v348 = vand.u32 2147483647, %v347
        %v350 = vcvt.s32.f32 %v343
        %v351 = vmul.f32 %v350, %v348
        %v352 = vxor.u32 %v351, 2147483648
        %v353 = vsel %vm270, %v352, %v351
        %v354 = vsub.s32 4, %v330
        %v355 = vsel %vm270, %v354, %v330
        %v356 = vsel %vm269, %v264, %v353
        %v357 = vsel %vm269, 0, %v355
        %v358 = vcosq.f32.pop %v356
        %v359 = vsinq.f32.pop %v356
        %vm360 = vweird.f32 %v264
        %v361 = vadd.s32 %v357, 3
        %v362 = vand.u32 %v361, 3
        %vm363 = vcmp.lt.s32.totalorder %v362, 2
        %vm364 = vcmp.eq.s32.totalorder %v362, 0
        %v365 = vxor.u32 %v359, 2147483648
        %v366 = vsel %vm364, %v358, %v365
        %vm367 = vcmp.eq.s32.totalorder %v362, 2
        %v368 = vxor.u32 %v358, 2147483648
        %v369 = vsel %vm367, %v368, %v359
        %v370 = vsel %vm363, %v366, %v369
        %v371 = vsel %vm360, nan, %v370
        %v372 = vand.u32 2147483647, %v265
        %vm373 = vcmp.le.f32.partialorder %v372, 0.7853982
        %vm374 = vcmp.lt.s32.totalorder %v265, 0
        %v375 = vand.u32 %v265, 2139095040
        %v376 = vshrl.u32 %v375, 23
        %v377 = vsub.s32 %v376, 127
        %v378 = vand.u32 2147483647, %v265
        %v379 = vand.u32 %v378, 8388607
        %v380 = vor.u32 %v379, 8388608
        %v381 = vsub.s32 0, %v380
        %v382 = vadd.s32 %v377, 1
        %vm383 = vcmp.gt.s32.totalorder %v382, 0
        %v384 = vsel %vm383, %v382, 0
        %v385 = vshrl.u32 %v384, 5
        %v386 = vand.u32 %v384, 31
        %v387 = vsub.s32 32, %v386
        %v388 = vshrl.u32 683565275, %v387
        %v389 = vshll.u32 683565275, %v386
        %v390 = vshrl.u32 2475754826, %v387
        %v391 = vor.u32 %v389, %v390
        %v392 = vshll.u32 2475754826, %v386
        %v393 = vshrl.u32 2131351028, %v387
        %v394 = vor.u32 %v392, %v393
        %v395 = vshll.u32 2131351028, %v386
        %v396 = vshrl.u32 2102212464, %v387
        %v397 = vor.u32 %v395, %v396
        %v398 = vshll.u32 2102212464, %v386
        %v399 = vshrl.u32 920167782, %v387
        %v400 = vor.u32 %v398, %v399
        %v401 = vshll.u32 920167782, %v386
        %v402 = vshrl.u32 1326507024, %v387
        %v403 = vor.u32 %v401, %v402
        %vm404 = vcmp.lt.s32.totalorder %v385, 1
        %vm405 = vcmp.lt.s32.totalorder %v385, 2
        %vm406 = vcmp.lt.s32.totalorder %v385, 3
        %vm407 = vcmp.lt.s32.totalorder %v385, 4
        %v408 = vsel %vm404, %v388, %v391
        %v409 = vsel %vm407, %v397, 2102212464
        %v410 = vsel %vm406, %v394, %v409
        %v411 = vsel %vm405, %v408, %v410
        %v412 = vsel %vm404, %v391, %v394
        %v413 = vsel %vm407, %v400, 920167782
        %v414 = vsel %vm406, %v397, %v413
        %v415 = vsel %vm405, %v412, %v414
        %v416 = vsel %vm404, %v394, %v397
        %v417 = vsel %vm407, %v403, 1326507024
        %v418 = vsel %vm406, %v400, %v417
        %v419 = vsel %vm405, %v416, %v418
        %v420 = vshll.u32 %v380, 8
        %v421 = vmul.u32.u64.compose %v420, %v419
        %v422 = vextract.low.u32 %v421
        %v423 = vextract.high.u32 %v421
        %v424 = vmul.u32.u64.compose %v420, %v415
        %v425 = vextract.low.u32 %v424
        %v426 = vextract.high.u32 %v424
        %v427 = vmul.u32 %v420, %v411
        %v428 = vadd.s32 %v423, %v425
        %vm429 = vc.u32 %v423, %v425
        %v430 = vadd.s32 %v426, 1
        %v431 = vsel %vm429, %v430, %v426
        %v432 = vadd.s32 %v427, %v431
        %v433 = vadd.s32 %v432, 536870912
        %v434 = vshrl.u32 %v433, 30
        %v435 = vshll.u32 %v434, 30
        %v436 = vsub.s32 %v432, %v435
        %vm437 = vcmp.lt.s32.totalorder %v436, 0
        %v438 = vsub.s32 0, %v436
        %v439 = vsel %vm437, %v438, %v436
        %v440 = vclz %v439
        %v441 = vsub.s32 %v440, 2
        %vm442 = vcmp.gt.s32.totalorder 0, %v441
        %v443 = vsel %vm442, 0, %v441
        %v444 = vsub.s32 32, %v443
        %v445 = vshll.u32 %v436, %v443
        %v446 = vshrl.u32 %v428, %v444
        %v447 = vor.u32 %v445, %v446
        %v448 = vsub.s32 4294967266, %v443
        %v449 = vadd.s32 %v448, 127
        %v450 = vshll.u32 %v449, 23
        %v451 = vor.u32 4788187, %v450
        %v452 = vand.u32 2147483647, %v451
        %v454 = vcvt.s32.f32 %v447
        %v455 = vmul.f32 %v454, %v452
        %v456 = vxor.u32 %v455, 2147483648
        %v457 = vsel %vm374, %v456, %v455
        %v458 = vsub.s32 4, %v434
        %v459 = vsel %vm374, %v458, %v434
        %v460 = vsel %vm373, %v265, %v457
        %v461 = vsel %vm373, 0, %v459
        %v462 = vcosq.f32.pop %v460
        %v463 = vsinq.f32.pop %v460
        %vm464 = vweird.f32 %v265
        %v465 = vadd.s32 %v461, 3
        %v466 = vand.u32 %v465, 3
        %vm467 = vcmp.lt.s32.totalorder %v466, 2
        %vm468 = vcmp.eq.s32.totalorder %v466, 0
        %v469 = vxor.u32 %v463, 2147483648
        %v470 = vsel %vm468, %v462, %v469
        %vm471 = vcmp.eq.s32.totalorder %v466, 2
        %v472 = vxor.u32 %v462, 2147483648
        %v473 = vsel %vm471, %v472, %v463
        %v474 = vsel %vm467, %v470, %v473
        %v475 = vsel %vm464, nan, %v474
        %v476 = vand.u32 2147483647, %v266
        %vm477 = vcmp.le.f32.partialorder %v476, 0.7853982
        %vm478 = vcmp.lt.s32.totalorder %v266, 0
        %v479 = vand.u32 %v266, 2139095040
        %v480 = vshrl.u32 %v479, 23
        %v481 = vsub.s32 %v480, 127
        %v482 = vand.u32 2147483647, %v266
        %v483 = vand.u32 %v482, 8388607
        %v484 = vor.u32 %v483, 8388608
        %v485 = vsub.s32 0, %v484
        %v486 = vadd.s32 %v481, 1
        %vm487 = vcmp.gt.s32.totalorder %v486, 0
        %v488 = vsel %vm487, %v486, 0
        %v489 = vshrl.u32 %v488, 5
        %v490 = vand.u32 %v488, 31
        %v491 = vsub.s32 32, %v490
        %v492 = vshrl.u32 683565275, %v491
        %v493 = vshll.u32 683565275, %v490
        %v494 = vshrl.u32 2475754826, %v491
        %v495 = vor.u32 %v493, %v494
        %v496 = vshll.u32 2475754826, %v490
        %v497 = vshrl.u32 2131351028, %v491
        %v498 = vor.u32 %v496, %v497
        %v499 = vshll.u32 2131351028, %v490
        %v500 = vshrl.u32 2102212464, %v491
        %v501 = vor.u32 %v499, %v500
        %v502 = vshll.u32 2102212464, %v490
        %v503 = vshrl.u32 920167782, %v491
        %v504 = vor.u32 %v502, %v503
        %v505 = vshll.u32 920167782, %v490
        %v506 = vshrl.u32 1326507024, %v491
        %v507 = vor.u32 %v505, %v506
        %vm508 = vcmp.lt.s32.totalorder %v489, 1
        %vm509 = vcmp.lt.s32.totalorder %v489, 2
        %vm510 = vcmp.lt.s32.totalorder %v489, 3
        %vm511 = vcmp.lt.s32.totalorder %v489, 4
        %v512 = vsel %vm508, %v492, %v495
        %v513 = vsel %vm511, %v501, 2102212464
        %v514 = vsel %vm510, %v498, %v513
        %v515 = vsel %vm509, %v512, %v514
        %v516 = vsel %vm508, %v495, %v498
        %v517 = vsel %vm511, %v504, 920167782
        %v518 = vsel %vm510, %v501, %v517
        %v519 = vsel %vm509, %v516, %v518
        %v520 = vsel %vm508, %v498, %v501
        %v521 = vsel %vm511, %v507, 1326507024
        %v522 = vsel %vm510, %v504, %v521
        %v523 = vsel %vm509, %v520, %v522
        %v524 = vshll.u32 %v484, 8
        %v525 = vmul.u32.u64.compose %v524, %v523
        %v526 = vextract.low.u32 %v525
        %v527 = vextract.high.u32 %v525
        %v528 = vmul.u32.u64.compose %v524, %v519
        %v529 = vextract.low.u32 %v528
        %v530 = vextract.high.u32 %v528
        %v531 = vmul.u32 %v524, %v515
        %v532 = vadd.s32 %v527, %v529
        %vm533 = vc.u32 %v527, %v529
        %v534 = vadd.s32 %v530, 1
        %v535 = vsel %vm533, %v534, %v530
        %v536 = vadd.s32 %v531, %v535
        %v537 = vadd.s32 %v536, 536870912
        %v538 = vshrl.u32 %v537, 30
        %v539 = vshll.u32 %v538, 30
        %v540 = vsub.s32 %v536, %v539
        %vm541 = vcmp.lt.s32.totalorder %v540, 0
        %v542 = vsub.s32 0, %v540
        %v543 = vsel %vm541, %v542, %v540
        %v544 = vclz %v543
        %v545 = vsub.s32 %v544, 2
        %vm546 = vcmp.gt.s32.totalorder 0, %v545
        %v547 = vsel %vm546, 0, %v545
        %v548 = vsub.s32 32, %v547
        %v549 = vshll.u32 %v540, %v547
        %v550 = vshrl.u32 %v532, %v548
        %v551 = vor.u32 %v549, %v550
        %v552 = vsub.s32 4294967266, %v547
        %v553 = vadd.s32 %v552, 127
        %v554 = vshll.u32 %v553, 23
        %v555 = vor.u32 4788187, %v554
        %v556 = vand.u32 2147483647, %v555
        %v558 = vcvt.s32.f32 %v551
        %v559 = vmul.f32 %v558, %v556
        %v560 = vxor.u32 %v559, 2147483648
        %v561 = vsel %vm478, %v560, %v559
        %v562 = vsub.s32 4, %v538
        %v563 = vsel %vm478, %v562, %v538
        %v564 = vsel %vm477, %v266, %v561
        %v565 = vsel %vm477, 0, %v563
        %v566 = vcosq.f32.pop %v564
        %v567 = vsinq.f32.pop %v564
        %vm568 = vweird.f32 %v266
        %v569 = vadd.s32 %v565, 3
        %v570 = vand.u32 %v569, 3
        %vm571 = vcmp.lt.s32.totalorder %v570, 2
        %vm572 = vcmp.eq.s32.totalorder %v570, 0
        %v573 = vxor.u32 %v567, 2147483648
        %v574 = vsel %vm572, %v566, %v573
        %vm575 = vcmp.eq.s32.totalorder %v570, 2
        %v576 = vxor.u32 %v566, 2147483648
        %v577 = vsel %vm575, %v576, %v567
        %v578 = vsel %vm571, %v574, %v577
        %v579 = vsel %vm568, nan, %v578
        %v580 = vand.u32 2147483647, %v267
        %vm581 = vcmp.le.f32.partialorder %v580, 0.7853982
        %vm582 = vcmp.lt.s32.totalorder %v267, 0
        %v583 = vand.u32 %v267, 2139095040
        %v584 = vshrl.u32 %v583, 23
        %v585 = vsub.s32 %v584, 127
        %v586 = vand.u32 2147483647, %v267
        %v587 = vand.u32 %v586, 8388607
        %v588 = vor.u32 %v587, 8388608
        %v589 = vsub.s32 0, %v588
        %v590 = vadd.s32 %v585, 1
        %vm591 = vcmp.gt.s32.totalorder %v590, 0
        %v592 = vsel %vm591, %v590, 0
        %v593 = vshrl.u32 %v592, 5
        %v594 = vand.u32 %v592, 31
        %v595 = vsub.s32 32, %v594
        %v596 = vshrl.u32 683565275, %v595
        %v597 = vshll.u32 683565275, %v594
        %v598 = vshrl.u32 2475754826, %v595
        %v599 = vor.u32 %v597, %v598
        %v600 = vshll.u32 2475754826, %v594
        %v601 = vshrl.u32 2131351028, %v595
        %v602 = vor.u32 %v600, %v601
        %v603 = vshll.u32 2131351028, %v594
        %v604 = vshrl.u32 2102212464, %v595
        %v605 = vor.u32 %v603, %v604
        %v606 = vshll.u32 2102212464, %v594
        %v607 = vshrl.u32 920167782, %v595
        %v608 = vor.u32 %v606, %v607
        %v609 = vshll.u32 920167782, %v594
        %v610 = vshrl.u32 1326507024, %v595
        %v611 = vor.u32 %v609, %v610
        %vm612 = vcmp.lt.s32.totalorder %v593, 1
        %vm613 = vcmp.lt.s32.totalorder %v593, 2
        %vm614 = vcmp.lt.s32.totalorder %v593, 3
        %vm615 = vcmp.lt.s32.totalorder %v593, 4
        %v616 = vsel %vm612, %v596, %v599
        %v617 = vsel %vm615, %v605, 2102212464
        %v618 = vsel %vm614, %v602, %v617
        %v619 = vsel %vm613, %v616, %v618
        %v620 = vsel %vm612, %v599, %v602
        %v621 = vsel %vm615, %v608, 920167782
        %v622 = vsel %vm614, %v605, %v621
        %v623 = vsel %vm613, %v620, %v622
        %v624 = vsel %vm612, %v602, %v605
        %v625 = vsel %vm615, %v611, 1326507024
        %v626 = vsel %vm614, %v608, %v625
        %v627 = vsel %vm613, %v624, %v626
        %v628 = vshll.u32 %v588, 8
        %v629 = vmul.u32.u64.compose %v628, %v627
        %v630 = vextract.low.u32 %v629
        %v631 = vextract.high.u32 %v629
        %v632 = vmul.u32.u64.compose %v628, %v623
        %v633 = vextract.low.u32 %v632
        %v634 = vextract.high.u32 %v632
        %v635 = vmul.u32 %v628, %v619
        %v636 = vadd.s32 %v631, %v633
        %vm637 = vc.u32 %v631, %v633
        %v638 = vadd.s32 %v634, 1
        %v639 = vsel %vm637, %v638, %v634
        %v640 = vadd.s32 %v635, %v639
        %v641 = vadd.s32 %v640, 536870912
        %v642 = vshrl.u32 %v641, 30
        %v643 = vshll.u32 %v642, 30
        %v644 = vsub.s32 %v640, %v643
        %vm645 = vcmp.lt.s32.totalorder %v644, 0
        %v646 = vsub.s32 0, %v644
        %v647 = vsel %vm645, %v646, %v644
        %v648 = vclz %v647
        %v649 = vsub.s32 %v648, 2
        %vm650 = vcmp.gt.s32.totalorder 0, %v649
        %v651 = vsel %vm650, 0, %v649
        %v652 = vsub.s32 32, %v651
        %v653 = vshll.u32 %v644, %v651
        %v654 = vshrl.u32 %v636, %v652
        %v655 = vor.u32 %v653, %v654
        %v656 = vsub.s32 4294967266, %v651
        %v657 = vadd.s32 %v656, 127
        %v658 = vshll.u32 %v657, 23
        %v659 = vor.u32 4788187, %v658
        %v660 = vand.u32 2147483647, %v659
        %v662 = vcvt.s32.f32 %v655
        %v663 = vmul.f32 %v662, %v660
        %v664 = vxor.u32 %v663, 2147483648
        %v665 = vsel %vm582, %v664, %v663
        %v666 = vsub.s32 4, %v642
        %v667 = vsel %vm582, %v666, %v642
        %v668 = vsel %vm581, %v267, %v665
        %v669 = vsel %vm581, 0, %v667
        %v670 = vcosq.f32.pop %v668
        %v671 = vsinq.f32.pop %v668
        %vm672 = vweird.f32 %v267
        %v673 = vadd.s32 %v669, 3
        %v674 = vand.u32 %v673, 3
        %vm675 = vcmp.lt.s32.totalorder %v674, 2
        %vm676 = vcmp.eq.s32.totalorder %v674, 0
        %v677 = vxor.u32 %v671, 2147483648
        %v678 = vsel %vm676, %v670, %v677
        %vm679 = vcmp.eq.s32.totalorder %v674, 2
        %v680 = vxor.u32 %v670, 2147483648
        %v681 = vsel %vm679, %v680, %v671
        %v682 = vsel %vm675, %v678, %v681
        %v683 = vsel %vm672, nan, %v682
        %v684 = vlaneseq
        %v685 = vshrl.u32 %v684, 7
        %v686 = vsub.s32 0, %v685
        %v687 = vrot.slane %v227, %v686
        %vm688 = vcmask 130048
        %v690 = vsel %vm688, %v221, 0
        %v693 = vsel %vm688, %v222, 0
        %v696 = vsel %vm688, %v223, 0
        %v699 = vsel %vm688, %v224, 0
        %701 = vmatprep.subr.mxu0 0.0
        %702 = vmatpush1.msra.mxu0 %v225
        %703 = vmatprep.subr.mxu0 0.0
        %704 = vmatpush1.msra.mxu0 %v226
        %705 = vmatprep.subr.mxu0 0.0
        %706 = vmatpush1.msra.mxu0 0.0
        %707 = vmatprep.subr.mxu0 0.0
        %708 = vmatpush1.msra.mxu0 0.0
        %709 = vmatprep.subr.mxu0 0.0
        %710 = vmatpush1.msra.mxu0 0.0
        %711 = vmatprep.subr.mxu0 0.0
        %712 = vmatpush1.msra.mxu0 0.0
        %713 = vmatprep.subr.mxu0 0.0
        %714 = vmatpush1.msra.mxu0 0.0
        %715 = vmatprep.subr.mxu0 0.0
        %716 = vmatpush1.msra.mxu0 0.0
        %717 = vmatprep.subr.mxu0 0.0
        %718 = vmatpush1.msra.mxu0 0.0
        %719 = vmatprep.subr.mxu0 0.0
        %720 = vmatpush1.msra.mxu0 0.0
        %721 = vmatprep.subr.mxu0 0.0
        %722 = vmatpush1.msra.mxu0 0.0
        %723 = vmatprep.subr.mxu0 0.0
        %724 = vmatpush1.msra.mxu0 0.0
        %725 = vmatprep.subr.mxu0 0.0
        %726 = vmatpush1.msra.mxu0 0.0
        %727 = vmatprep.subr.mxu0 0.0
        %728 = vmatpush1.msra.mxu0 0.0
        %729 = vmatprep.subr.mxu0 0.0
        %730 = vmatpush1.msra.mxu0 0.0
        %731 = vmatprep.subr.mxu0 0.0
        %732 = vmatpush1.msra.mxu0 0.0
        %733 = vmatprep.subr.mxu0 0.0
        %734 = vmatpush1.msra.mxu0 0.0
        %735 = vmatprep.subr.mxu0 0.0
        %736 = vmatpush1.msra.mxu0 0.0
        %737 = vmatprep.subr.mxu0 0.0
        %738 = vmatpush1.msra.mxu0 0.0
        %739 = vmatprep.subr.mxu0 0.0
        %740 = vmatpush1.msra.mxu0 0.0
        %741 = vmatprep.subr.mxu0 0.0
        %742 = vmatpush1.msra.mxu0 0.0
        %743 = vmatprep.subr.mxu0 0.0
        %744 = vmatpush1.msra.mxu0 0.0
        %745 = vmatprep.subr.mxu0 0.0
        %746 = vmatpush1.msra.mxu0 0.0
        %747 = vmatprep.subr.mxu0 0.0
        %748 = vmatpush1.msra.mxu0 0.0
        %749 = vmatprep.subr.mxu0 0.0
        %750 = vmatpush1.msra.mxu0 0.0
        %751 = vmatprep.subr.mxu0 0.0
        %752 = vmatpush1.msra.mxu0 0.0
        %753 = vmatprep.subr.mxu0 0.0
        %754 = vmatpush1.msra.mxu0 0.0
        %755 = vmatprep.subr.mxu0 0.0
        %756 = vmatpush1.msra.mxu0 0.0
        %757 = vmatprep.subr.mxu0 0.0
        %758 = vmatpush1.msra.mxu0 0.0
        %759 = vmatprep.subr.mxu0 0.0
        %760 = vmatpush1.msra.mxu0 0.0
        %761 = vmatprep.subr.mxu0 0.0
        %762 = vmatpush1.msra.mxu0 0.0
        %763 = vmatprep.subr.mxu0 0.0
        %764 = vmatpush1.msra.mxu0 0.0
        %765 = vmatprep.mubr.f32.mxu0 0.0
        %766 = vmatmul.mubr.f32.gmra.mrb[0].mxu0 %v690
        %v767 = vpop.f32.mrb[0].mxu0
        %v768 = vadd.f32 %v687, %v767
        %v769 = vpop.f32.mrb[0].mxu0
        %770 = vmatprep.mubr.f32.mxu0 0.0
        %771 = vmatmul.mubr.f32.gmra.mrb[0].mxu0 %v693
        %v772 = vpop.f32.mrb[0].mxu0
        %v773 = vadd.f32 %v687, %v772
        %v774 = vpop.f32.mrb[0].mxu0
        %775 = vmatprep.mubr.f32.mxu0 0.0
        %776 = vmatmul.mubr.f32.gmra.mrb[0].mxu0 %v696
        %v777 = vpop.f32.mrb[0].mxu0
        %v778 = vadd.f32 %v687, %v777
        %v779 = vpop.f32.mrb[0].mxu0
        %780 = vmatprep.mubr.f32.mxu0 0.0
        %781 = vmatmul.mubr.f32.gmra.mrb[0].mxu0 %v699
        %v782 = vpop.f32.mrb[0].mxu0
        %v783 = vadd.f32 %v687, %v782
        %v784 = vpop.f32.mrb[0].mxu0
        %785 = vdwg.mxu0
        %v786 = vadd.f32 %v768, %v371
        %v787 = vadd.f32 %v773, %v475
        %v788 = vadd.f32 %v778, %v579
        %v789 = vadd.f32 %v783, %v683
        %790 = vst [vmem:[%s207] sm:$0xff] %v786
        %791 = vst [vmem:[%s207 + $0x8] sm:$0xff] %v787
        %792 = vst [vmem:[%s207 + $0x10] sm:$0xff] %v788
        %793 = vst [vmem:[%s207 + $0x18] sm:$0xff] %v789
        %s794 = sand.u32 %s120, 1
        %s795 = scalar_lea.sflag [#allocation3], %s794
        %s796 = sand.u32 %s120, 1
        %s797 = smul.addr %s796, 32
        %s798 = scalar_lea.vmem [#allocation2], %s797
        // Predicated region
        $region37: #{tpu_custom_call.1} parent=35 // pred_check
          %p799 = pneg %p130
        $region38: #{tpu_custom_call.1} parent=35 // pred_check_branch
          %801 = sbr.rel (%p799) target = $region40
        $region39: #{tpu_custom_call.1} parent=35 // pred_region
          %s802 = smul.u32 4, %s18
          %s804 = ssub.s32 512, 512
          %805 = vsyncadd %s795, %s804
          %s806 = smul.addr %s802, 128
          %s807 = scalar_lea.hbm %s4, %s806
          %s808 = sshll.u32 %s798, 4
          %s809 = int_to_ptr.vmem [resolvable:$true] %s808
          %814 = dma.vmem_to_hbm [thread:$0]  %s809, 512, %s807, %s795, 128, 128, 8
        $region40: #{tpu_custom_call.1} parent=35 // pred_fallthru
          _
      $region36: #{tpu_custom_call.1} parent=5 // pred_fallthru
        _
      %p815 = scmp.le.s32.totalorder 2, %s13
      // Predicated region
      $region41: #{tpu_custom_call.1} parent=5 // pred_check
        %p816 = pneg %p815
      $region42: #{tpu_custom_call.1} parent=5 // pred_check_branch
        %818 = sbr.rel (%p816) target = $region44
      $region43: #{tpu_custom_call.1} parent=5 // pred_region
        %s819 = ssub.s32 %s13, 2
        // Predicated region
        $region45: #{tpu_custom_call.1} parent=43 // pred_check
          %p820 = pneg %p136
        $region46: #{tpu_custom_call.1} parent=43 // pred_check_branch
          %822 = sbr.rel (%p820) target = $region48
        $region47: #{tpu_custom_call.1} parent=43 // pred_region
          %s823 = sand.u32 %s121, 1
          %s824 = scalar_lea.sflag [#allocation3], %s823
          %s825 = sand.u32 %s121, 1
          %s826 = smul.addr %s825, 32
          %s827 = scalar_lea.vmem [#allocation2], %s826
          %828 = dma.done %s824, 512
        $region48: #{tpu_custom_call.1} parent=43 // pred_fallthru
          _
      $region44: #{tpu_custom_call.1} parent=5 // pred_fallthru
        _
    $region6: #{tpu_custom_call.1} parent=1 // loop_footer
      %s17 = sadd.s32 1, %s13
    $region7: #{tpu_custom_call.1} parent=1 // loop_footer_branch
      %12 = sbr.rel target = $region3
    $region8: #{tpu_custom_call.1} parent=1 // loop_exit
      _
    %829 = vsyncpa [#allocation3], 1
    %s830 = scalar_lea.sflag [#allocation3], 1
    %831 = vsyncpa %s830, 1

</llo_original>
